<compile_context>
chip_gen: v6e
topology: v6e:2x2x1
jax: 0.10.0
libtpu: 0.0.40
codegen_flags: <defaults>
</compile_context>

<pallas_src>
import functools

import jax
import jax.numpy as jnp
from jax.experimental import pallas as pl
from jax.experimental.pallas import tpu as pltpu

_LANES = 128


def _cdiv(a, b):
    return -(-a // b)


def _round_up(x, m):
    return ((x + m - 1) // m) * m


def _dsvdd_kernel_unweighted(rep_ref, c_ref, out_ref, *, valid_rows, block_rows):
    """acc(8, L) += fold_8(mask((rep - c)^2)); accumulates into the resident out block."""
    p = pl.program_id(0)
    i = pl.program_id(1)
    steps = pl.num_programs(1)

    @pl.when(i == 0)
    def _():
        out_ref[...] = jnp.zeros_like(out_ref)

    x = rep_ref[...].astype(jnp.float32)          # bf16 streams as bf16, cast in-kernel
    diff = x - c_ref[...]
    sq = diff * diff                              # (block_rows, lanes)
    rows, lanes = sq.shape

    def _accum(vals):
        # Fold to (8, lanes) with pure vreg+vreg adds (no XLU, no big VMEM RMW).
        out_ref[...] += vals.reshape(rows // 8, 8, lanes).sum(axis=0)[None]

    row0 = (p * steps + i) * block_rows           # logical first row of this block
    full = row0 + block_rows <= valid_rows

    @pl.when(full)
    def _():
        _accum(sq)

    @pl.when(jnp.logical_not(full))
    def _():
        gids = row0 + jax.lax.broadcasted_iota(jnp.int32, sq.shape, 0)
        _accum(jnp.where(gids < valid_rows, sq, 0.0))


def _dsvdd_kernel_weighted(rep_ref, w_ref, c_ref, out_ref, *, valid_rows, block_rows):
    """acc(1, d) += w(1, block_n) @ mask((rep - c)^2); weight-mul + row reduction on the MXU."""
    p = pl.program_id(0)
    i = pl.program_id(1)
    steps = pl.num_programs(1)

    @pl.when(i == 0)
    def _():
        out_ref[...] = jnp.zeros_like(out_ref)

    x = rep_ref[...].astype(jnp.float32)
    diff = x - c_ref[...]
    sq = diff * diff                              # (block_n, d)
    w = w_ref[0]                                  # (1, block_n), zero-padded in wrapper

    row0 = (p * steps + i) * block_rows
    full = row0 + block_rows <= valid_rows

    @pl.when(full)
    def _():
        out_ref[...] += jnp.dot(w, sq, preferred_element_type=jnp.float32)[None]

    @pl.when(jnp.logical_not(full))
    def _():
        gids = row0 + jax.lax.broadcasted_iota(jnp.int32, sq.shape, 0)
        sq_m = jnp.where(gids < valid_rows, sq, 0.0)   # padded w is 0; mask sq so 0*NaN cannot leak
        out_ref[...] += jnp.dot(w, sq_m, preferred_element_type=jnp.float32)[None]


def dsvdd_loss(rep, c, sample_weight=None, reduction="mean", *,
               max_block_bytes=2 * 1024 * 1024):
    """Pallas implementation of DSVDDLoss.forward with reduction in {'mean','sum'}."""
    rep = jnp.asarray(rep)
    if rep.dtype not in (jnp.bfloat16, jnp.float32):
        rep = rep.astype(jnp.float32)
    n, d = rep.shape
    c32 = jnp.broadcast_to(jnp.asarray(c, jnp.float32).reshape(1, -1), (1, d))

    if reduction == "mean":
        scale = 1.0 / float(n)
    elif reduction == "sum":
        scale = 1.0
    else:
        # TODO(synk): reduction='none' (per-sample vector output) is not implemented;
        # COUTA training only exercises 'mean'/'sum'.
        raise NotImplementedError("reduction must be 'mean' or 'sum'")

    itemsize = jnp.dtype(rep.dtype).itemsize
    compiler_params = pltpu.CompilerParams(
        dimension_semantics=("parallel", "arbitrary"),
        vmem_limit_bytes=32 * 1024 * 1024,
    )

    # ---------- lane-dense path: unweighted, D | 128 and (N*D) % 128 == 0 ----------
    if (sample_weight is None and d <= _LANES and _LANES % d == 0
            and (n * d) % _LANES == 0):
        rows = (n * d) // _LANES                       # packed 128-wide rows, exact
        cap_rows = max(8, (max_block_bytes // (_LANES * itemsize)) // 8 * 8)
        block_rows = min(cap_rows, _round_up(rows, 8))
        total_steps = _cdiv(rows, block_rows)
        num_splits = 2 if total_steps >= 2 else 1
        steps = _cdiv(total_steps, num_splits)

        rep_packed = rep.reshape(rows, _LANES)         # pure row-major reshape, no padding
        c_packed = jnp.tile(c32, (1, _LANES // d))

        kernel = functools.partial(_dsvdd_kernel_unweighted,
                                   valid_rows=rows, block_rows=block_rows)
        out = pl.pallas_call(
            kernel,
            out_shape=jax.ShapeDtypeStruct((num_splits, 8, _LANES), jnp.float32),
            grid_spec=pltpu.PrefetchScalarGridSpec(
                num_scalar_prefetch=0,
                grid=(num_splits, steps),
                in_specs=[
                    pl.BlockSpec((block_rows, _LANES), lambda p, i: (p * steps + i, 0)),
                    pl.BlockSpec((1, _LANES), lambda p, i: (0, 0)),
                ],
                out_specs=pl.BlockSpec((1, 8, _LANES), lambda p, i: (p, 0, 0)),
            ),
            compiler_params=compiler_params,
        )(rep_packed, c_packed)
        return jnp.sum(out) * scale

    # ---------- natural (N, D) layout: weighted, or D not packing into 128 ----------
    padded_row_bytes = _round_up(d, _LANES) * itemsize     # real lane-padded VMEM footprint
    cap_rows = max(8, (max_block_bytes // padded_row_bytes) // 8 * 8)
    block_n = min(cap_rows, _round_up(n, 8))
    total_steps = _cdiv(n, block_n)
    num_splits = 2 if total_steps >= 2 else 1
    steps = _cdiv(total_steps, num_splits)

    if sample_weight is None:
        kernel = functools.partial(_dsvdd_kernel_unweighted,
                                   valid_rows=n, block_rows=block_n)
        out = pl.pallas_call(
            kernel,
            out_shape=jax.ShapeDtypeStruct((num_splits, 8, d), jnp.float32),
            grid_spec=pltpu.PrefetchScalarGridSpec(
                num_scalar_prefetch=0,
                grid=(num_splits, steps),
                in_specs=[
                    pl.BlockSpec((block_n, d), lambda p, i: (p * steps + i, 0)),
                    pl.BlockSpec((1, d), lambda p, i: (0, 0)),
                ],
                out_specs=pl.BlockSpec((1, 8, d), lambda p, i: (p, 0, 0)),
            ),
            compiler_params=compiler_params,
        )(rep, c32)
        return jnp.sum(out) * scale

    # Weighted: weights streamed lane-dense; padded (zeros) only for the tiny w vector.
    num_blocks = num_splits * steps
    w = jnp.asarray(sample_weight, jnp.float32).reshape(-1)
    n_pad = num_blocks * block_n
    w_padded = jnp.pad(w, (0, n_pad - n)).reshape(num_blocks, 1, block_n)

    kernel = functools.partial(_dsvdd_kernel_weighted,
                               valid_rows=n, block_rows=block_n)
    out = pl.pallas_call(
        kernel,
        out_shape=jax.ShapeDtypeStruct((num_splits, 1, d), jnp.float32),
        grid_spec=pltpu.PrefetchScalarGridSpec(
            num_scalar_prefetch=0,
            grid=(num_splits, steps),
            in_specs=[
                pl.BlockSpec((block_n, d), lambda p, i: (p * steps + i, 0)),
                pl.BlockSpec((1, 1, block_n), lambda p, i: (p * steps + i, 0, 0)),
                pl.BlockSpec((1, d), lambda p, i: (0, 0)),
            ],
            out_specs=pl.BlockSpec((1, 1, d), lambda p, i: (p, 0, 0)),
        ),
        compiler_params=compiler_params,
    )(rep, w_padded, c32)
    return jnp.sum(out) * scale


def _reference(rep, c, sample_weight=None, reduction="mean"):
    rep = jnp.asarray(rep, jnp.float32)
    loss = jnp.sum((rep - jnp.asarray(c, jnp.float32).reshape(1, -1)) ** 2, axis=1)
    if sample_weight is not None:
        loss = loss * jnp.asarray(sample_weight, jnp.float32)
    if reduction == "mean":
        return jnp.mean(loss)
    elif reduction == "sum":
        return jnp.sum(loss)
    return loss


if __name__ == "__main__":
    key = jax.random.PRNGKey(0)
    ks = jax.random.split(key, 6)

    # Shapes consistent with COUTA usage: batch=16, hidden=32.
    N, D = 16, 32
    rep = jax.random.normal(ks[0], (N, D), dtype=jnp.float32)
    c = jax.random.normal(ks[1], (D,), dtype=jnp.float32)
    w = jax.random.uniform(ks[2], (N,), dtype=jnp.float32) + 0.5

    # 1) Unweighted, mean reduction (lane-dense packed path).
    out = dsvdd_loss(rep, c, reduction="mean")
    jax.block_until_ready(out)
    ref = _reference(rep, c, reduction="mean")
    assert jnp.allclose(out, ref, rtol=1e-5, atol=1e-5), (out, ref)

    # 2) Weighted, sum reduction (natural layout, MXU-weighted path).
    out = dsvdd_loss(rep, c, sample_weight=w, reduction="sum")
    jax.block_until_ready(out)
    ref = _reference(rep, c, sample_weight=w, reduction="sum")
    assert jnp.allclose(out, ref, rtol=1e-5, atol=1e-5), (out, ref)

    # 3) Odd batch and D not dividing 128 (natural path, ragged row mask).
    N2, D2 = 10, 48
    rep2 = jax.random.normal(ks[3], (N2, D2), dtype=jnp.float32)
    c2 = jax.random.normal(ks[4], (D2,), dtype=jnp.float32)
    out2 = dsvdd_loss(rep2, c2, reduction="mean")
    jax.block_until_ready(out2)
    ref2 = _reference(rep2, c2, reduction="mean")
    assert jnp.allclose(out2, ref2, rtol=1e-5, atol=1e-5), (out2, ref2)

    # 4) bf16 input with a tiny block budget to exercise multi-block + 2-way split grid.
    N3, D3 = 100, 32
    rep3 = jax.random.normal(ks[5], (N3, D3), dtype=jnp.bfloat16)
    c3 = jax.random.normal(ks[4], (D3,), dtype=jnp.float32)
    out3 = dsvdd_loss(rep3, c3, reduction="mean", max_block_bytes=2048)
    jax.block_until_ready(out3)
    ref3 = _reference(rep3, c3, reduction="mean")
    assert jnp.allclose(out3, ref3, rtol=1e-4, atol=1e-4), (out3, ref3)

    # 5) Weighted multi-block split with a ragged, zero-padded tail.
    w3 = jax.random.uniform(ks[2], (N3,), dtype=jnp.float32)
    out4 = dsvdd_loss(rep3.astype(jnp.float32), c3, sample_weight=w3,
                      reduction="sum", max_block_bytes=2048)
    jax.block_until_ready(out4)
    ref4 = _reference(rep3.astype(jnp.float32), c3, sample_weight=w3, reduction="sum")
    assert jnp.allclose(out4, ref4, rtol=1e-4, atol=1e-4), (out4, ref4)

    print("KERNEL_OK")
</pallas_src>

<mosaic_0001>
module attributes {stable_mosaic.version = 11 : i64} {
  func.func @_dsvdd_kernel_unweighted(%arg0: i32, %arg1: i32, %arg2: memref<8x128xf32, #tpu.memory_space<vmem>>, %arg3: memref<1x128xf32, #tpu.memory_space<vmem>>, %arg4: memref<1x8x128xf32, #tpu.memory_space<vmem>>) attributes {dimension_semantics = [#tpu.dimension_semantics<parallel>, #tpu.dimension_semantics<arbitrary>], iteration_bounds = array<i64: 1, 1>, scalar_prefetch = 0 : i64, scratch_operands = 0 : i64, tpu.core_type = #tpu.core_type<tc>, window_params = [{transform_indices = @transform_0, window_bounds = array<i64: 8, 128>}, {pipeline_mode = #tpu.pipeline_mode<synchronous>, transform_indices = @transform_1, window_bounds = array<i64: 1, 128>}, {transform_indices = @transform_2, window_bounds = array<i64: 1, 8, 128>}]} {
    %c0_i32 = arith.constant 0 : i32
    %0 = arith.cmpi eq, %arg1, %c0_i32 : i32
    %1 = arith.extui %0 : i1 to i32
    %c0_i32_0 = arith.constant 0 : i32
    %2 = arith.cmpi ne, %1, %c0_i32_0 : i32
    scf.if %2 {
      %cst = arith.constant 0.000000e+00 : f32
      %18 = vector.broadcast %cst : f32 to vector<1x8x128xf32>
      %c0_7 = arith.constant 0 : index
      %c0_8 = arith.constant 0 : index
      %c0_9 = arith.constant 0 : index
      %19 = vector.load %arg4[%c0_7, %c0_8, %c0_9] : memref<1x8x128xf32, #tpu.memory_space<vmem>>, vector<1x8x128xf32>
      tpu.vector_store %arg4[%c0_7, %c0_8, %c0_9], %18 {strides = array<i32>} : memref<1x8x128xf32, #tpu.memory_space<vmem>>, vector<1x8x128xf32>,
    } else {
    }
    %c0 = arith.constant 0 : index
    %c0_1 = arith.constant 0 : index
    %3 = vector.load %arg2[%c0, %c0_1] : memref<8x128xf32, #tpu.memory_space<vmem>>, vector<8x128xf32>
    %c0_2 = arith.constant 0 : index
    %c0_3 = arith.constant 0 : index
    %4 = vector.load %arg3[%c0_2, %c0_3] : memref<1x128xf32, #tpu.memory_space<vmem>>, vector<1x128xf32>
    %5 = vector.broadcast %4 : vector<1x128xf32> to vector<8x128xf32>
    %6 = arith.subf %3, %5 : vector<8x128xf32>
    %7 = arith.mulf %6, %6 : vector<8x128xf32>
    %c1_i32 = arith.constant 1 : i32
    %8 = arith.muli %arg0, %c1_i32 : i32
    %9 = arith.addi %8, %arg1 : i32
    %c8_i32 = arith.constant 8 : i32
    %10 = arith.muli %9, %c8_i32 : i32
    %c8_i32_4 = arith.constant 8 : i32
    %11 = arith.addi %10, %c8_i32_4 : i32
    %c4_i32 = arith.constant 4 : i32
    %12 = arith.cmpi sle, %11, %c4_i32 : i32
    %13 = arith.extui %12 : i1 to i32
    %c0_i32_5 = arith.constant 0 : i32
    %14 = arith.cmpi ne, %13, %c0_i32_5 : i32
    scf.if %14 {
      %c0_7 = arith.constant 0 : index
      %c0_8 = arith.constant 0 : index
      %c0_9 = arith.constant 0 : index
      %18 = vector.load %arg4[%c0_7, %c0_8, %c0_9] : memref<1x8x128xf32, #tpu.memory_space<vmem>>, vector<1x8x128xf32>
      %19 = vector.shape_cast %7 : vector<8x128xf32> to vector<1x8x128xf32>
      %cst = arith.constant dense<0.000000e+00> : vector<8x128xf32>
      %20 = vector.multi_reduction <add>, %19, %cst [0] : vector<1x8x128xf32> to vector<8x128xf32>
      %21 = vector.shape_cast %20 : vector<8x128xf32> to vector<1x8x128xf32>
      %22 = arith.addf %18, %21 : vector<1x8x128xf32>
      %c0_10 = arith.constant 0 : index
      %c0_11 = arith.constant 0 : index
      %c0_12 = arith.constant 0 : index
      %23 = vector.load %arg4[%c0_10, %c0_11, %c0_12] : memref<1x8x128xf32, #tpu.memory_space<vmem>>, vector<1x8x128xf32>
      tpu.vector_store %arg4[%c0_10, %c0_11, %c0_12], %22 {strides = array<i32>} : memref<1x8x128xf32, #tpu.memory_space<vmem>>, vector<1x8x128xf32>,
    } else {
    }
    %true = arith.constant true
    %15 = arith.xori %12, %true : i1
    %16 = arith.extui %15 : i1 to i32
    %c0_i32_6 = arith.constant 0 : i32
    %17 = arith.cmpi ne, %16, %c0_i32_6 : i32
    scf.if %17 {
      %18 = tpu.iota {dimensions = array<i32: 0>} : vector<8x128xi32>
      %19 = vector.broadcast %10 : i32 to vector<8x128xi32>
      %20 = arith.addi %19, %18 : vector<8x128xi32>
      %c4_i32_7 = arith.constant 4 : i32
      %21 = vector.broadcast %c4_i32_7 : i32 to vector<8x128xi32>
      %22 = arith.cmpi slt, %20, %21 : vector<8x128xi32>
      %cst = arith.constant 0.000000e+00 : f32
      %23 = vector.broadcast %cst : f32 to vector<8x128xf32>
      %24 = arith.select %22, %7, %23 : vector<8x128xi1>, vector<8x128xf32>
      %c0_8 = arith.constant 0 : index
      %c0_9 = arith.constant 0 : index
      %c0_10 = arith.constant 0 : index
      %25 = vector.load %arg4[%c0_8, %c0_9, %c0_10] : memref<1x8x128xf32, #tpu.memory_space<vmem>>, vector<1x8x128xf32>
      %26 = vector.shape_cast %24 : vector<8x128xf32> to vector<1x8x128xf32>
      %cst_11 = arith.constant dense<0.000000e+00> : vector<8x128xf32>
      %27 = vector.multi_reduction <add>, %26, %cst_11 [0] : vector<1x8x128xf32> to vector<8x128xf32>
      %28 = vector.shape_cast %27 : vector<8x128xf32> to vector<1x8x128xf32>
      %29 = arith.addf %25, %28 : vector<1x8x128xf32>
      %c0_12 = arith.constant 0 : index
      %c0_13 = arith.constant 0 : index
      %c0_14 = arith.constant 0 : index
      %30 = vector.load %arg4[%c0_12, %c0_13, %c0_14] : memref<1x8x128xf32, #tpu.memory_space<vmem>>, vector<1x8x128xf32>
      tpu.vector_store %arg4[%c0_12, %c0_13, %c0_14], %29 {strides = array<i32>} : memref<1x8x128xf32, #tpu.memory_space<vmem>>, vector<1x8x128xf32>,
    } else {
    }
    return
  }
  func.func @transform_0(%arg0: i32, %arg1: i32) -> (i32, i32) {
    %c1_i32 = arith.constant 1 : i32
    %0 = arith.muli %arg0, %c1_i32 : i32
    %1 = arith.addi %0, %arg1 : i32
    %c0_i32 = arith.constant 0 : i32
    %c0_i32_0 = arith.constant 0 : i32
    return %1, %c0_i32 : i32, i32
  }
  func.func @transform_1(%arg0: i32, %arg1: i32) -> (i32, i32) {
    %c0_i32 = arith.constant 0 : i32
    %c0_i32_0 = arith.constant 0 : i32
    %c0_i32_1 = arith.constant 0 : i32
    return %c0_i32, %c0_i32_0 : i32, i32
  }
  func.func @transform_2(%arg0: i32, %arg1: i32) -> (i32, i32, i32) {
    %c0_i32 = arith.constant 0 : i32
    %c0_i32_0 = arith.constant 0 : i32
    %c0_i32_1 = arith.constant 0 : i32
    return %arg0, %c0_i32, %c0_i32_0 : i32, i32, i32
  }
}

</mosaic_0001>

<llo_original>
// kernel: tpu_custom_call.1
$region0: #{tpu_custom_call.1}
  #allocation0 [shape = 'u32[]', space=smem, size = 0x4, offset = 0x4, fixed_abs, tag = 'smem constant byte address 0x4 - core index']
  #allocation1 [shape = 'u32[144,128]{1,0:T(1,128)}', space=vmem, size = 0x12000, scoped, tag = 'internal scratch']
  %s0 = inlined_call_operand.hbm [shape: f32[4,128], index: 0, kind: input, shape index: {}]
  %s1 = inlined_call_operand.vmem [shape: f32[1,128], index: 1, kind: input, shape index: {}]
  %s2 = inlined_call_operand.hbm [shape: f32[1,8,128], index: 2, kind: output, shape index: {}]
  %s3 = sld [smem:[#allocation0]]
  $region34: #{tpu_custom_call.1} parent=0
    _
  %s5 = ssub.s32 1, %s3
  %s6 = scalar_select 0, %s5, %s3
  $region1: #{tpu_custom_call.1} parent=0
    #allocation2 [shape = 'u8[4096]{0}', space=vmem, size = 0x1000, scoped, tag = 'input window, operand 0, single buffered']
    #allocation3 [shape = 's32[1]{0}', space=sflag, size = 0x4, scoped, tag = 'scoped memory for tpu_custom_call.1']
    #allocation4 [shape = 's32[1]{0}', space=sflag, size = 0x4, scoped, tag = 'scoped memory for tpu_custom_call.1']
    #allocation5 [shape = 'u8[4096]{0}', space=vmem, size = 0x1000, scoped, tag = 'output window, operand 0, single buffered']
    %7 = vsyncpa [#allocation3], 0
    %8 = vsyncpa [#allocation4], 0
    // Predicated region
    $region2: #{tpu_custom_call.1} parent=1 // pred_check
      _
    $region3: #{tpu_custom_call.1} parent=1 // pred_check_branch
      %10 = sbr.rel (0) target = $region5
    $region4: #{tpu_custom_call.1} parent=1 // pred_region
      %s11 = sadd.s32 0, 0
      %s12 = smul.u32 2, %s11
      %s13 = ssub.s32 1, %s12
      %s14 = smul.u32 64, %s13
      %s16 = ssub.s32 128, %s14
      %17 = vsyncadd [#allocation3], %s16
      %p18 = scmp.ne.s32.totalorder 0, %s14
      %s19 = smul.addr %s12, 64
      %s20 = scalar_lea.hbm %s0, %s19
      %s21 = smul.u32 4, %s13
      %s22 = sshll.u32 [#allocation2], 4
      %s23 = int_to_ptr.vmem [resolvable:$true] %s22
      %s24 = sshll.u32 %s21, 4
      %28 = dma.hbm_to_vmem [thread:$0]  (%p18), %s20, %s24, %s23, [#allocation3], 64, 64, 4
    $region5: #{tpu_custom_call.1} parent=1 // pred_fallthru
      _
    // Predicated region
    $region6: #{tpu_custom_call.1} parent=1 // pred_check
      _
    $region7: #{tpu_custom_call.1} parent=1 // pred_check_branch
      %30 = sbr.rel (0) target = $region9
    $region8: #{tpu_custom_call.1} parent=1 // pred_region
      _
    $region9: #{tpu_custom_call.1} parent=1 // pred_fallthru
      _
    // Predicated region
    $region10: #{tpu_custom_call.1} parent=1 // pred_check
      _
    $region11: #{tpu_custom_call.1} parent=1 // pred_check_branch
      %32 = sbr.rel (0) target = $region13
    $region12: #{tpu_custom_call.1} parent=1 // pred_region
      %33 = dma.done [#allocation3], 128
    $region13: #{tpu_custom_call.1} parent=1 // pred_fallthru
      _
    %s34 = sadd.s32 0, 0
    %s35 = smul.u32 2, %s34
    %s36 = ssub.s32 1, %s35
    %s37 = smul.u32 64, %s36
    %p38 = scmp.eq.s32.totalorder 0, 0
    // Predicated region
    $region14: #{tpu_custom_call.1} parent=1 // pred_check
      %p39 = pneg %p38
    $region15: #{tpu_custom_call.1} parent=1 // pred_check_branch
      %41 = sbr.rel (%p39) target = $region17
    $region16: #{tpu_custom_call.1} parent=1 // pred_region
      %42 = vst [vmem:[#allocation5] sm:$0xff] 0.0
    $region17: #{tpu_custom_call.1} parent=1 // pred_fallthru
      _
    %v43 = vld [vmem:[#allocation2] sm:$0xff]
    %v44 = vld [vmem:[%s1] sm:$0x1]
    %v46 = vlaneseq
    %v47 = vshrl.u32 %v46, 7
    %v48 = vsub.s32 0, %v47
    %v49 = vrot.slane %v44, %v48
    %v51 = vsub.f32 %v43, %v49
    %v52 = vmul.f32 %v51, %v51
    %s53 = sadd.s32 0, 0
    %s54 = smul.u32 %s53, 8
    %s55 = sadd.s32 %s54, 8
    %p56 = scmp.le.s32.totalorder %s55, 4
    // Predicated region
    $region18: #{tpu_custom_call.1} parent=1 // pred_check
      %p57 = pneg %p56
    $region19: #{tpu_custom_call.1} parent=1 // pred_check_branch
      %59 = sbr.rel (%p57) target = $region21
    $region20: #{tpu_custom_call.1} parent=1 // pred_region
      %v60 = vld [vmem:[#allocation5] sm:$0xff]
      %v61 = vadd.f32 %v52, 0.0
      %v62 = vadd.f32 %v60, %v61
      %63 = vst [vmem:[#allocation5] sm:$0xff] %v62
    $region21: #{tpu_custom_call.1} parent=1 // pred_fallthru
      _
    %p64 = scmp.gt.s32.totalorder %s55, 4
    // Predicated region
    $region22: #{tpu_custom_call.1} parent=1 // pred_check
      %p65 = pneg %p64
    $region23: #{tpu_custom_call.1} parent=1 // pred_check_branch
      %67 = sbr.rel (%p65) target = $region25
    $region24: #{tpu_custom_call.1} parent=1 // pred_region
      %v68 = vlaneseq
      %v69 = vshrl.u32 %v68, 7
      %v70 = vstv %s54
      %v71 = vadd.s32 %v70, %v69
      %vm72 = vcmp.lt.s32.totalorder %v71, 4
      %v73 = vsel %vm72, %v52, 0.0
      %v74 = vld [vmem:[#allocation5] sm:$0xff]
      %v75 = vadd.f32 %v73, 0.0
      %v76 = vadd.f32 %v74, %v75
      %77 = vst [vmem:[#allocation5] sm:$0xff] %v76
    $region25: #{tpu_custom_call.1} parent=1 // pred_fallthru
      _
    // Predicated region
    $region26: #{tpu_custom_call.1} parent=1 // pred_check
      _
    $region27: #{tpu_custom_call.1} parent=1 // pred_check_branch
      %79 = sbr.rel (0) target = $region29
    $region28: #{tpu_custom_call.1} parent=1 // pred_region
      %s81 = ssub.s32 128, 128
      %82 = vsyncadd [#allocation4], %s81
      %s84 = sshll.u32 [#allocation5], 4
      %s85 = int_to_ptr.vmem [resolvable:$true] %s84
      %87 = dma.vmem_to_hbm [thread:$0]  %s85, 128, %s2, [#allocation4]
    $region29: #{tpu_custom_call.1} parent=1 // pred_fallthru
      _
    // Predicated region
    $region30: #{tpu_custom_call.1} parent=1 // pred_check
      _
    $region31: #{tpu_custom_call.1} parent=1 // pred_check_branch
      %89 = sbr.rel (0) target = $region33
    $region32: #{tpu_custom_call.1} parent=1 // pred_region
      %90 = dma.done [#allocation4], 128
    $region33: #{tpu_custom_call.1} parent=1 // pred_fallthru
      _
    %91 = vsyncpa [#allocation3], 1
    %92 = vsyncpa [#allocation4], 1

</llo_original>
